<compile_context>
chip_gen: v6e
topology: v6e:2x2x1
jax: 0.10.0
libtpu: 0.0.40
codegen_flags: <defaults>
</compile_context>

<pallas_src>
import jax
import jax.numpy as jnp
from jax.experimental import pallas as pl
from jax.experimental.pallas import tpu as pltpu


def _relu_kernel(x_ref, o_ref):
    # Elementwise hot path: ReLU on the VMEM tile, in the native dtype.
    # (Plain ReLU, i.e. negative_slope == 0, matching custom_cpp.relu.)
    o_ref[...] = jnp.maximum(x_ref[...], jnp.zeros((), dtype=x_ref.dtype))


_LANE = 128
_TARGET_TILE_BYTES = 8 * 1024 * 1024   # 8 MiB/block; x4 (in+out, double-buffered) = 32 MiB
_VMEM_LIMIT_BYTES = 48 * 1024 * 1024   # > v5e 16 MiB default scoped, < v7x 64 MiB physical
_MIN_PARALLEL_STEPS = 4                # keep >= 4 grid steps so both v7x TCs stay busy


def custom_leaky_relu(x: jax.Array, *, donate: bool = False,
                      min_pallas_bytes: int = 1 << 20) -> jax.Array:
    """ReLU matching CustomReLUFunction.forward / custom_cpp.relu.

    Large tensors whose element count is a multiple of 128 go through a
    lane-dense, multi-MiB-tile Pallas kernel; everything else (small tensors,
    ragged element counts, empty tensors) takes a plain jnp.maximum fallback,
    which is already at the HBM roofline and avoids any pad/slice traffic.

    donate=True aliases the output onto the input HBM buffer on the Pallas
    path (footprint relief only, not a bandwidth win).
    """
    orig_shape = x.shape
    orig_dtype = x.dtype
    total = x.size

    if total == 0:
        return x

    itemsize = jnp.dtype(orig_dtype).itemsize
    nbytes = total * itemsize

    # Fallback path: small tensors or non-128-aligned element counts.
    # A fused XLA elementwise max is 1x read + 1x write (optimal) and skips
    # the pallas_call launch / fusion-barrier cost entirely.
    if nbytes < min_pallas_bytes or total % _LANE != 0:
        return jnp.maximum(x, jnp.zeros((), dtype=orig_dtype))

    # ---- Pallas fast path (total is a multiple of 128, no padding ever) ----

    # Sublane packing factor: 8 for 32-bit, 16 for bf16/f16, 32 for int8/fp8.
    pack = 8 * max(1, 4 // itemsize)

    # Widest lane-dense last dim that divides the flat length (bigger,
    # unmasked vst stores and longer contiguous DMAs).
    cols = _LANE
    for c in (1024, 512, 256, 128):
        if total % c == 0:
            cols = c
            break
    rows = total // cols

    # Block rows: ~_TARGET_TILE_BYTES per tile, rounded down to the packing
    # factor, then capped so the (parallel) grid has >= _MIN_PARALLEL_STEPS
    # steps when the tensor is big enough, and finally clamped to `rows`
    # (a full-extent block is always legal).
    block_rows = (_TARGET_TILE_BYTES // (cols * itemsize)) // pack * pack
    block_rows = max(block_rows, pack)
    cap = (rows // _MIN_PARALLEL_STEPS) // pack * pack
    if cap >= pack:
        block_rows = min(block_rows, cap)
    if block_rows >= rows:
        block_rows = rows
    grid = (pl.cdiv(rows, block_rows),)

    x2d = jnp.reshape(x, (rows, cols))

    out2d = pl.pallas_call(
        _relu_kernel,
        out_shape=jax.ShapeDtypeStruct((rows, cols), orig_dtype),
        grid_spec=pltpu.PrefetchScalarGridSpec(
            num_scalar_prefetch=0,
            grid=grid,
            in_specs=[pl.BlockSpec((block_rows, cols), lambda i: (i, 0))],
            out_specs=pl.BlockSpec((block_rows, cols), lambda i: (i, 0)),
        ),
        compiler_params=pltpu.CompilerParams(
            dimension_semantics=("parallel",),
            vmem_limit_bytes=_VMEM_LIMIT_BYTES,
        ),
        input_output_aliases=({0: 0} if donate else {}),
    )(x2d)

    return jnp.reshape(out2d, orig_shape)


if __name__ == "__main__":
    key = jax.random.PRNGKey(0)

    # Small NCHW input consistent with the module's typical use.
    x = jax.random.normal(key, (2, 4, 16, 16), dtype=jnp.float32)
    ref = jnp.maximum(x, 0.0)

    # Force the Pallas path on the small demo input (2048 elems, 128-aligned)
    # so the kernel itself is exercised.
    y = custom_leaky_relu(x, min_pallas_bytes=0)
    jax.block_until_ready(y)
    assert y.shape == x.shape and y.dtype == x.dtype
    assert jnp.array_equal(y, ref), "mismatch vs reference ReLU (forced Pallas)"

    # Default (auto) dispatch on the same input hits the XLA fallback.
    assert jnp.array_equal(custom_leaky_relu(x), ref)

    # Larger 128-aligned input exercises the multi-block parallel grid
    # (4*16*64*64 = 262144 elems = 1 MiB -> cols=1024, several row blocks).
    xl = jax.random.normal(jax.random.PRNGKey(1), (4, 16, 64, 64), dtype=jnp.float32)
    yl = custom_leaky_relu(xl)
    jax.block_until_ready(yl)
    assert jnp.array_equal(yl, jnp.maximum(xl, 0.0))

    # Non-multiple-of-128 element count -> zero-extra-traffic XLA fallback.
    x2 = jax.random.normal(jax.random.PRNGKey(2), (3, 5, 7, 3), dtype=jnp.float32)
    assert jnp.array_equal(custom_leaky_relu(x2), jnp.maximum(x2, 0.0))

    # bf16, forced Pallas path (covers packed-sublane tiles).
    x3 = jax.random.normal(jax.random.PRNGKey(3), (2, 4, 16, 16)).astype(jnp.bfloat16)
    y3 = custom_leaky_relu(x3, min_pallas_bytes=0)
    jax.block_until_ready(y3)
    assert y3.dtype == jnp.bfloat16
    assert jnp.array_equal(y3, jnp.maximum(x3, jnp.bfloat16(0)))

    print("KERNEL_OK")
</pallas_src>

<mosaic_0001>
module attributes {stable_mosaic.version = 11 : i64} {
  func.func @_relu_kernel(%arg0: i32, %arg1: memref<2x1024xf32, #tpu.memory_space<vmem>>, %arg2: memref<2x1024xf32, #tpu.memory_space<vmem>>) attributes {dimension_semantics = [#tpu.dimension_semantics<parallel>], iteration_bounds = array<i64: 1>, scalar_prefetch = 0 : i64, scratch_operands = 0 : i64, tpu.core_type = #tpu.core_type<tc>, window_params = [{transform_indices = @transform_0, window_bounds = array<i64: 2, 1024>}, {transform_indices = @transform_1, window_bounds = array<i64: 2, 1024>}]} {
    %c0 = arith.constant 0 : index
    %c0_0 = arith.constant 0 : index
    %0 = vector.load %arg1[%c0, %c0_0] : memref<2x1024xf32, #tpu.memory_space<vmem>>, vector<2x1024xf32>
    %cst = arith.constant 0.000000e+00 : f32
    %1 = vector.broadcast %cst : f32 to vector<2x1024xf32>
    %2 = arith.maximumf %0, %1 : vector<2x1024xf32>
    %c0_1 = arith.constant 0 : index
    %c0_2 = arith.constant 0 : index
    %3 = vector.load %arg2[%c0_1, %c0_2] : memref<2x1024xf32, #tpu.memory_space<vmem>>, vector<2x1024xf32>
    tpu.vector_store %arg2[%c0_1, %c0_2], %2 {strides = array<i32>} : memref<2x1024xf32, #tpu.memory_space<vmem>>, vector<2x1024xf32>,
    return
  }
  func.func @transform_0(%arg0: i32) -> (i32, i32) {
    %c0_i32 = arith.constant 0 : i32
    %c0_i32_0 = arith.constant 0 : i32
    return %arg0, %c0_i32 : i32, i32
  }
  func.func @transform_1(%arg0: i32) -> (i32, i32) {
    %c0_i32 = arith.constant 0 : i32
    %c0_i32_0 = arith.constant 0 : i32
    return %arg0, %c0_i32 : i32, i32
  }
}

</mosaic_0001>

<llo_original>
// kernel: tpu_custom_call.1
$region0: #{tpu_custom_call.1}
  #allocation0 [shape = 'u32[]', space=smem, size = 0x4, offset = 0x4, fixed_abs, tag = 'smem constant byte address 0x4 - core index']
  #allocation1 [shape = 'u32[144,128]{1,0:T(1,128)}', space=vmem, size = 0x12000, scoped, tag = 'internal scratch']
  %s0 = inlined_call_operand.hbm [shape: f32[2,1024], index: 0, kind: input, shape index: {}]
  %s1 = inlined_call_operand.hbm [shape: f32[2,1024], index: 1, kind: output, shape index: {}]
  %s2 = sld [smem:[#allocation0]]
  $region18: #{tpu_custom_call.1} parent=0
    _
  %s4 = ssub.s32 1, %s2
  %s5 = scalar_select 0, %s4, %s2
  $region1: #{tpu_custom_call.1} parent=0
    #allocation2 [shape = 'u8[8192]{0}', space=vmem, size = 0x2000, scoped, tag = 'input window, operand 0, single buffered']
    #allocation3 [shape = 's32[1]{0}', space=sflag, size = 0x4, scoped, tag = 'scoped memory for tpu_custom_call.1']
    #allocation4 [shape = 's32[1]{0}', space=sflag, size = 0x4, scoped, tag = 'scoped memory for tpu_custom_call.1']
    #allocation5 [shape = 'u8[8192]{0}', space=vmem, size = 0x2000, scoped, tag = 'output window, operand 0, single buffered']
    %6 = vsyncpa [#allocation3], 0
    %7 = vsyncpa [#allocation4], 0
    // Predicated region
    $region2: #{tpu_custom_call.1} parent=1 // pred_check
      _
    $region3: #{tpu_custom_call.1} parent=1 // pred_check_branch
      %9 = sbr.rel (0) target = $region5
    $region4: #{tpu_custom_call.1} parent=1 // pred_region
      %s11 = ssub.s32 256, 256
      %12 = vsyncadd [#allocation3], %s11
      %s14 = sshll.u32 [#allocation2], 4
      %s15 = int_to_ptr.vmem [resolvable:$true] %s14
      %17 = dma.hbm_to_vmem [thread:$0]  %s0, 256, %s15, [#allocation3]
    $region5: #{tpu_custom_call.1} parent=1 // pred_fallthru
      _
    // Predicated region
    $region6: #{tpu_custom_call.1} parent=1 // pred_check
      _
    $region7: #{tpu_custom_call.1} parent=1 // pred_check_branch
      %19 = sbr.rel (0) target = $region9
    $region8: #{tpu_custom_call.1} parent=1 // pred_region
      %20 = dma.done [#allocation3], 256
    $region9: #{tpu_custom_call.1} parent=1 // pred_fallthru
      _
    %v21 = vld [vmem:[#allocation2] sm:$0xff]
    %v22 = vld [vmem:[#allocation2 + $0x8] sm:$0xff]
    %v23 = vmax.f32 %v21, 0.0
    %v24 = vmax.f32 %v22, 0.0
    %25 = vst [vmem:[#allocation5] sm:$0xff] %v23
    %26 = vst [vmem:[#allocation5 + $0x8] sm:$0xff] %v24
    // Predicated region
    $region10: #{tpu_custom_call.1} parent=1 // pred_check
      _
    $region11: #{tpu_custom_call.1} parent=1 // pred_check_branch
      %28 = sbr.rel (0) target = $region13
    $region12: #{tpu_custom_call.1} parent=1 // pred_region
      %s30 = ssub.s32 256, 256
      %31 = vsyncadd [#allocation4], %s30
      %s33 = sshll.u32 [#allocation5], 4
      %s34 = int_to_ptr.vmem [resolvable:$true] %s33
      %36 = dma.vmem_to_hbm [thread:$0]  %s34, 256, %s1, [#allocation4]
    $region13: #{tpu_custom_call.1} parent=1 // pred_fallthru
      _
    // Predicated region
    $region14: #{tpu_custom_call.1} parent=1 // pred_check
      _
    $region15: #{tpu_custom_call.1} parent=1 // pred_check_branch
      %38 = sbr.rel (0) target = $region17
    $region16: #{tpu_custom_call.1} parent=1 // pred_region
      %39 = dma.done [#allocation4], 256
    $region17: #{tpu_custom_call.1} parent=1 // pred_fallthru
      _
    %40 = vsyncpa [#allocation3], 1
    %41 = vsyncpa [#allocation4], 1

</llo_original>
